<compile_context>
chip_gen: v6e
topology: v6e:2x2x1
jax: 0.10.0
libtpu: 0.0.40
codegen_flags: <defaults>
</compile_context>

<pallas_src>
import math

import jax
import jax.numpy as jnp
from jax import lax
from jax.experimental import pallas as pl
from jax.experimental.pallas import tpu as pltpu


# --------------------------------------------------------------------------- #
# Kernel
# --------------------------------------------------------------------------- #
def _linkpred_kernel(zs_ref, zd_ref,      # (tm, C) activation tiles (input dtype)
                     ws_ref, wd_ref,      # (C, C)  resident weights (input dtype)
                     b_ref,               # (1, C)  fused hidden bias (f32)
                     wf_ref,              # (1, C)  final weight row (f32)
                     bf_ref,              # (1, 1)  final bias, SMEM scalar (f32)
                     o_ref):              # (1, 1, tm) lane-dense output tile
    # Two (tm, C) x (C, C) matmuls on the MXU, f32 accumulation.
    h = jnp.dot(zs_ref[...], ws_ref[...], preferred_element_type=jnp.float32)
    h = h + jnp.dot(zd_ref[...], wd_ref[...], preferred_element_type=jnp.float32)
    # Fused bias + ReLU on the VPU, kept in f32.
    h = jnp.maximum(h + b_ref[...], 0.0)
    # lin_final as wf_row @ h^T -> (1, tm): the result is lane-major, so the
    # store is a dense row store instead of a masked (tm, 1) column store.
    # wf and h stay f32 (no precision-losing downcast of the whole h tile).
    logits = lax.dot_general(
        wf_ref[...], h,
        dimension_numbers=(((1,), (1,)), ((), ())),
        preferred_element_type=jnp.float32)            # (1, tm)
    p = jax.nn.sigmoid(logits + bf_ref[0, 0])          # f32 sigmoid (EUP)
    o_ref[...] = p.reshape(o_ref.shape).astype(o_ref.dtype)


# --------------------------------------------------------------------------- #
# Tiling heuristics
# --------------------------------------------------------------------------- #
def _rup(x, m):
    return ((x + m - 1) // m) * m


def _hw_params():
    """(vmem_capacity_bytes, two_tensorcores).  Conservative (v7x-safe) defaults."""
    vmem_bytes = 64 << 20
    try:
        info = pltpu.get_tpu_info()
        vmem_bytes = int(getattr(info, "vmem_capacity_bytes", vmem_bytes))
    except Exception:
        pass
    # v7x is the only generation with 64 MiB VMEM per TensorCore and 2 TCs per
    # chip; v5e / v6e have 128 MiB and a single TC.
    two_cores = vmem_bytes <= (64 << 20)
    return vmem_bytes, two_cores


def _pick_tm(n_rows, c, elem_bytes, budget, two_cores):
    """Row-tile heuristic (generation-aware).

    * Resident weights are single-buffered (pl.Buffered(1)) -> counted once.
    * z_src / z_dst tiles are double-buffered by the Pallas pipeline.
    * 2-TC parts (v7x): keep >= 2 grid steps so the "parallel" axis gives both
      TensorCores work; 1-TC parts (v5e/v6e): one big block is strictly better
      (removes the ~0.35 us per-grid-step overhead).
    """
    c128 = _rup(c, 128)
    c8 = _rup(c, 8)
    # Single-buffered resident weights + padded (8,128) bias/wf rows.
    fixed = elem_bytes * 2 * c8 * c128 + 3 * 4 * 8 * 128

    def fits(rows):
        rows8 = _rup(rows, 8)
        need = (fixed
                + 2 * 2 * rows8 * c128 * elem_bytes     # double-buffered z tiles
                + 2 * _rup(rows8, 128) * 4)             # double-buffered out row
        return need <= budget

    # Small / mid batches: one exact block over the whole batch (full-dim block
    # -> no (8,128) constraint, no padded rows, no per-step overhead).  On
    # 2-TC parts only do this for tiny batches so the grid keeps >= 2 steps.
    single_cap = 256 if two_cores else 8192
    if n_rows <= single_cap and fits(n_rows):
        return n_rows

    min_steps = 2 if two_cores else 1
    for tm in (8192, 4096, 2048, 1024, 512, 256, 128):
        if fits(tm) and pl.cdiv(n_rows, tm) >= min_steps:
            return tm
    # Very large C: falls back to the smallest tile.  For in_channels where
    # 2*C^2 weights no longer fit VMEM, K-blocking of the weights (second
    # "arbitrary" grid axis + f32 accumulator scratch) would be the next step.
    return 128


def _const_spec(shape, single_buffer):
    """BlockSpec for a constant-index (resident) input; single-buffered if possible."""
    zeros = lambda i: (0,) * len(shape)
    if single_buffer:
        try:
            return pl.BlockSpec(shape, zeros, pipeline_mode=pl.Buffered(1))
        except TypeError:
            pass
    return pl.BlockSpec(shape, zeros)


# --------------------------------------------------------------------------- #
# Wrapper
# --------------------------------------------------------------------------- #
def link_predictor(z_src, z_dst, params, *, tm=None):
    """params: dict with w_src, b_src, w_dst, b_dst, w_final, b_final
    (weights pre-transposed to (in, out))."""
    N, C = z_src.shape
    assert z_dst.shape == (N, C)
    out_dtype = z_src.dtype
    sdt = z_src.dtype                       # stream in the caller's dtype (no extra HBM pass)
    eb = jnp.dtype(sdt).itemsize

    vmem_bytes, two_cores = _hw_params()
    budget = max(vmem_bytes // 2, 16 << 20)  # ~64 MiB on v5e/v6e, ~32 MiB on v7x

    if tm is None:
        tm = _pick_tm(N, C, eb, budget, two_cores)
    tm = int(min(tm, N))
    G = pl.cdiv(N, tm)

    # Tiny parameter tensors: cast weights to the streaming dtype (native MXU
    # rate for bf16 inputs); biases / final row stay f32 (they are (1, C)).
    ws = params["w_src"].astype(sdt)
    wd = params["w_dst"].astype(sdt)
    b = (params["b_src"] + params["b_dst"]).astype(jnp.float32).reshape(1, C)
    wf = params["w_final"].astype(jnp.float32).reshape(1, C)
    bf = params["b_final"].astype(jnp.float32).reshape(1, 1)

    row_spec = pl.BlockSpec((tm, C), lambda i: (i, 0))

    cost = pl.CostEstimate(
        flops=int(4 * N * C * C + 2 * N * C),
        transcendentals=int(N),
        bytes_accessed=int(2 * N * C * eb + 2 * C * C * eb
                           + N * jnp.dtype(out_dtype).itemsize),
    )

    def build(single_buffer_consts):
        return pl.pallas_call(
            _linkpred_kernel,
            out_shape=jax.ShapeDtypeStruct((G, 1, tm), out_dtype),
            grid=(G,),
            in_specs=[
                row_spec,                                   # z_src tile
                row_spec,                                   # z_dst tile
                _const_spec((C, C), single_buffer_consts),  # w_src (resident)
                _const_spec((C, C), single_buffer_consts),  # w_dst (resident)
                _const_spec((1, C), single_buffer_consts),  # fused hidden bias row
                _const_spec((1, C), single_buffer_consts),  # w_final row
                pl.BlockSpec(memory_space=pltpu.MemorySpace.SMEM),  # b_final scalar
            ],
            out_specs=pl.BlockSpec((1, 1, tm), lambda i: (i, 0, 0)),
            compiler_params=pltpu.CompilerParams(
                dimension_semantics=("parallel",),  # shards grid across v7x's 2 TCs
                vmem_limit_bytes=int(budget),
            ),
            cost_estimate=cost,
        )

    try:
        out = build(True)(z_src, z_dst, ws, wd, b, wf, bf)
    except Exception:
        # Fallback if this JAX build rejects pipeline_mode=pl.Buffered(1).
        out = build(False)(z_src, z_dst, ws, wd, b, wf, bf)

    # (G, 1, tm) flattens row-major to padded row order g*tm + t; drop padding.
    return out.reshape(G * tm, 1)[:N]


# --------------------------------------------------------------------------- #
# Parameter init (torch.nn.Linear-style) and pure-JAX reference
# --------------------------------------------------------------------------- #
def init_link_predictor_params(key, in_channels, dtype=jnp.float32):
    """U(-1/sqrt(fan_in), 1/sqrt(fan_in)); weights already transposed to (in, out)."""
    ks = jax.random.split(key, 6)
    bound = 1.0 / math.sqrt(in_channels)

    def u(k, shape):
        return jax.random.uniform(k, shape, dtype, minval=-bound, maxval=bound)

    return {
        "w_src":   u(ks[0], (in_channels, in_channels)),
        "b_src":   u(ks[1], (1, in_channels)),
        "w_dst":   u(ks[2], (in_channels, in_channels)),
        "b_dst":   u(ks[3], (1, in_channels)),
        "w_final": u(ks[4], (in_channels, 1)),
        "b_final": u(ks[5], (1, 1)),
    }


def _reference(z_src, z_dst, p):
    h = z_src @ p["w_src"] + p["b_src"] + z_dst @ p["w_dst"] + p["b_dst"]
    h = jnp.maximum(h, 0.0)
    return jax.nn.sigmoid(h @ p["w_final"] + p["b_final"])


# --------------------------------------------------------------------------- #
# Self-test
# --------------------------------------------------------------------------- #
if __name__ == "__main__":
    key = jax.random.PRNGKey(0)
    k_p0, k_s0, k_d0, k_p1, k_s1, k_d1 = jax.random.split(key, 6)

    # Small case (single exact block, matches typical TGN head usage).
    C0, N0 = 32, 8
    params0 = init_link_predictor_params(k_p0, C0)
    zs0 = jax.random.normal(k_s0, (N0, C0), jnp.float32)
    zd0 = jax.random.normal(k_d0, (N0, C0), jnp.float32)
    out0 = jax.block_until_ready(link_predictor(zs0, zd0, params0))
    ref0 = _reference(zs0, zd0, params0)
    assert out0.shape == (N0, 1)
    assert jnp.allclose(out0, ref0, atol=1e-5, rtol=1e-5), "small case mismatch"

    # Unaligned case (C=100, N=300): no wrapper-side pad/cast of the streams;
    # one exact block on 1-TC parts, two partial blocks on v7x.
    C1, N1 = 100, 300
    params1 = init_link_predictor_params(k_p1, C1)
    zs1 = jax.random.normal(k_s1, (N1, C1), jnp.float32)
    zd1 = jax.random.normal(k_d1, (N1, C1), jnp.float32)
    out1 = jax.block_until_ready(link_predictor(zs1, zd1, params1))
    ref1 = _reference(zs1, zd1, params1)
    assert out1.shape == (N1, 1)
    assert jnp.allclose(out1, ref1, atol=2e-5, rtol=1e-5), "large case mismatch"

    # Forced multi-step grid with a partial last block (exercises the clamped
    # last-block path on every TPU generation).
    out1_tiled = jax.block_until_ready(link_predictor(zs1, zd1, params1, tm=128))
    assert jnp.allclose(out1_tiled, ref1, atol=2e-5, rtol=1e-5), "tiled case mismatch"

    # bf16 inputs stream natively (half HBM bytes, native MXU rate); the
    # accumulation, bias+ReLU, final dot and sigmoid stay f32 in-kernel.
    zs1b = zs1.astype(jnp.bfloat16)
    zd1b = zd1.astype(jnp.bfloat16)
    out_bf16 = jax.block_until_ready(link_predictor(zs1b, zd1b, params1))
    assert out_bf16.dtype == jnp.bfloat16
    assert jnp.allclose(out_bf16.astype(jnp.float32), ref1, atol=3e-2), "bf16 case mismatch"

    print("KERNEL_OK")
</pallas_src>

<mosaic_0001>
module attributes {stable_mosaic.version = 11 : i64} {
  func.func @_linkpred_kernel(%arg0: i32, %arg1: memref<8x32xf32, #tpu.memory_space<vmem>>, %arg2: memref<8x32xf32, #tpu.memory_space<vmem>>, %arg3: memref<32x32xf32, #tpu.memory_space<vmem>>, %arg4: memref<32x32xf32, #tpu.memory_space<vmem>>, %arg5: memref<1x32xf32, #tpu.memory_space<vmem>>, %arg6: memref<1x32xf32, #tpu.memory_space<vmem>>, %arg7: memref<1x1xf32, #tpu.memory_space<smem>>, %arg8: memref<1x1x8xf32, #tpu.memory_space<vmem>>) attributes {dimension_semantics = [#tpu.dimension_semantics<parallel>], iteration_bounds = array<i64: 1>, scalar_prefetch = 0 : i64, scratch_operands = 0 : i64, tpu.core_type = #tpu.core_type<tc>, window_params = [{transform_indices = @transform_0, window_bounds = array<i64: 8, 32>}, {transform_indices = @transform_1, window_bounds = array<i64: 8, 32>}, {pipeline_mode = #tpu.pipeline_mode<synchronous>, transform_indices = @transform_2, window_bounds = array<i64: 32, 32>}, {pipeline_mode = #tpu.pipeline_mode<synchronous>, transform_indices = @transform_3, window_bounds = array<i64: 32, 32>}, {pipeline_mode = #tpu.pipeline_mode<synchronous>, transform_indices = @transform_4, window_bounds = array<i64: 1, 32>}, {pipeline_mode = #tpu.pipeline_mode<synchronous>, transform_indices = @transform_5, window_bounds = array<i64: 1, 32>}, {transform_indices = @transform_6, window_bounds = array<i64: 1, 1>}, {transform_indices = @transform_7, window_bounds = array<i64: 1, 1, 8>}]} {
    %c0 = arith.constant 0 : index
    %c0_0 = arith.constant 0 : index
    %0 = vector.load %arg1[%c0, %c0_0] : memref<8x32xf32, #tpu.memory_space<vmem>>, vector<8x32xf32>
    %c0_1 = arith.constant 0 : index
    %c0_2 = arith.constant 0 : index
    %1 = vector.load %arg3[%c0_1, %c0_2] : memref<32x32xf32, #tpu.memory_space<vmem>>, vector<32x32xf32>
    %cst = arith.constant dense<0.000000e+00> : vector<8x32xf32>
    %2 = tpu.matmul %0, %1, %cst {dimension_numbers = #tpu.dot_dimension_numbers<[1], [0], [0], [1], [0, 0, 1, 1], [], []>} : vector<8x32xf32>, vector<32x32xf32>, vector<8x32xf32> -> vector<8x32xf32>
    %c0_3 = arith.constant 0 : index
    %c0_4 = arith.constant 0 : index
    %3 = vector.load %arg2[%c0_3, %c0_4] : memref<8x32xf32, #tpu.memory_space<vmem>>, vector<8x32xf32>
    %c0_5 = arith.constant 0 : index
    %c0_6 = arith.constant 0 : index
    %4 = vector.load %arg4[%c0_5, %c0_6] : memref<32x32xf32, #tpu.memory_space<vmem>>, vector<32x32xf32>
    %cst_7 = arith.constant dense<0.000000e+00> : vector<8x32xf32>
    %5 = tpu.matmul %3, %4, %cst_7 {dimension_numbers = #tpu.dot_dimension_numbers<[1], [0], [0], [1], [0, 0, 1, 1], [], []>} : vector<8x32xf32>, vector<32x32xf32>, vector<8x32xf32> -> vector<8x32xf32>
    %6 = arith.addf %2, %5 : vector<8x32xf32>
    %c0_8 = arith.constant 0 : index
    %c0_9 = arith.constant 0 : index
    %7 = vector.load %arg5[%c0_8, %c0_9] : memref<1x32xf32, #tpu.memory_space<vmem>>, vector<1x32xf32>
    %8 = vector.broadcast %7 : vector<1x32xf32> to vector<8x32xf32>
    %9 = arith.addf %6, %8 : vector<8x32xf32>
    %cst_10 = arith.constant 0.000000e+00 : f32
    %10 = vector.broadcast %cst_10 : f32 to vector<8x32xf32>
    %11 = arith.maximumf %9, %10 : vector<8x32xf32>
    %c0_11 = arith.constant 0 : index
    %c0_12 = arith.constant 0 : index
    %12 = vector.load %arg6[%c0_11, %c0_12] : memref<1x32xf32, #tpu.memory_space<vmem>>, vector<1x32xf32>
    %cst_13 = arith.constant dense<0.000000e+00> : vector<1x8xf32>
    %13 = tpu.matmul %12, %11, %cst_13 {dimension_numbers = #tpu.dot_dimension_numbers<[1], [1], [0], [0], [0, 0, 1, 0], [], []>} : vector<1x32xf32>, vector<8x32xf32>, vector<1x8xf32> -> vector<1x8xf32>
    %c0_14 = arith.constant 0 : index
    %c0_15 = arith.constant 0 : index
    %14 = memref.load %arg7[%c0_14, %c0_15] : memref<1x1xf32, #tpu.memory_space<smem>>
    %15 = vector.broadcast %14 : f32 to vector<1x8xf32>
    %16 = arith.addf %13, %15 : vector<1x8xf32>
    %17 = arith.negf %16 : vector<1x8xf32>
    %18 = math.exp %17 : vector<1x8xf32>
    %cst_16 = arith.constant 1.000000e+00 : f32
    %19 = vector.broadcast %cst_16 : f32 to vector<1x8xf32>
    %20 = arith.addf %19, %18 : vector<1x8xf32>
    %21 = arith.divf %19, %20 : vector<1x8xf32>
    %22 = vector.shape_cast %21 : vector<1x8xf32> to vector<1x1x8xf32>
    %c0_17 = arith.constant 0 : index
    %c0_18 = arith.constant 0 : index
    %c0_19 = arith.constant 0 : index
    %23 = vector.load %arg8[%c0_17, %c0_18, %c0_19] : memref<1x1x8xf32, #tpu.memory_space<vmem>>, vector<1x1x8xf32>
    tpu.vector_store %arg8[%c0_17, %c0_18, %c0_19], %22 {strides = array<i32>} : memref<1x1x8xf32, #tpu.memory_space<vmem>>, vector<1x1x8xf32>,
    return
  }
  func.func @transform_0(%arg0: i32) -> (i32, i32) {
    %c0_i32 = arith.constant 0 : i32
    %c0_i32_0 = arith.constant 0 : i32
    return %arg0, %c0_i32 : i32, i32
  }
  func.func @transform_1(%arg0: i32) -> (i32, i32) {
    %c0_i32 = arith.constant 0 : i32
    %c0_i32_0 = arith.constant 0 : i32
    return %arg0, %c0_i32 : i32, i32
  }
  func.func @transform_2(%arg0: i32) -> (i32, i32) {
    %c0_i32 = arith.constant 0 : i32
    %c0_i32_0 = arith.constant 0 : i32
    %c0_i32_1 = arith.constant 0 : i32
    return %c0_i32, %c0_i32_0 : i32, i32
  }
  func.func @transform_3(%arg0: i32) -> (i32, i32) {
    %c0_i32 = arith.constant 0 : i32
    %c0_i32_0 = arith.constant 0 : i32
    %c0_i32_1 = arith.constant 0 : i32
    return %c0_i32, %c0_i32_0 : i32, i32
  }
  func.func @transform_4(%arg0: i32) -> (i32, i32) {
    %c0_i32 = arith.constant 0 : i32
    %c0_i32_0 = arith.constant 0 : i32
    %c0_i32_1 = arith.constant 0 : i32
    return %c0_i32, %c0_i32_0 : i32, i32
  }
  func.func @transform_5(%arg0: i32) -> (i32, i32) {
    %c0_i32 = arith.constant 0 : i32
    %c0_i32_0 = arith.constant 0 : i32
    %c0_i32_1 = arith.constant 0 : i32
    return %c0_i32, %c0_i32_0 : i32, i32
  }
  func.func @transform_6(%arg0: i32) -> (i32, i32) {
    %c0_i32 = arith.constant 0 : i32
    %c0_i32_0 = arith.constant 0 : i32
    %c0_i32_1 = arith.constant 0 : i32
    return %c0_i32, %c0_i32_0 : i32, i32
  }
  func.func @transform_7(%arg0: i32) -> (i32, i32, i32) {
    %c0_i32 = arith.constant 0 : i32
    %c0_i32_0 = arith.constant 0 : i32
    %c0_i32_1 = arith.constant 0 : i32
    return %arg0, %c0_i32, %c0_i32_0 : i32, i32, i32
  }
}

module attributes {stable_mosaic.version = 11 : i64} {
  func.func @_linkpred_kernel(%arg0: i32, %arg1: memref<8x32xf32, #tpu.memory_space<vmem>>, %arg2: memref<8x32xf32, #tpu.memory_space<vmem>>, %arg3: memref<32x32xf32, #tpu.memory_space<vmem>>, %arg4: memref<32x32xf32, #tpu.memory_space<vmem>>, %arg5: memref<1x32xf32, #tpu.memory_space<vmem>>, %arg6: memref<1x32xf32, #tpu.memory_space<vmem>>, %arg7: memref<1x1xf32, #tpu.memory_space<smem>>, %arg8: memref<1x1x8xf32, #tpu.memory_space<vmem>>) attributes {dimension_semantics = [#tpu.dimension_semantics<parallel>], iteration_bounds = array<i64: 1>, scalar_prefetch = 0 : i64, scratch_operands = 0 : i64, tpu.core_type = #tpu.core_type<tc>, window_params = [{transform_indices = @transform_0, window_bounds = array<i64: 8, 32>}, {transform_indices = @transform_1, window_bounds = array<i64: 8, 32>}, {pipeline_mode = #tpu.pipeline_mode<synchronous>, transform_indices = @transform_2, window_bounds = array<i64: 32, 32>}, {pipeline_mode = #tpu.pipeline_mode<synchronous>, transform_indices = @transform_3, window_bounds = array<i64: 32, 32>}, {pipeline_mode = #tpu.pipeline_mode<synchronous>, transform_indices = @transform_4, window_bounds = array<i64: 1, 32>}, {pipeline_mode = #tpu.pipeline_mode<synchronous>, transform_indices = @transform_5, window_bounds = array<i64: 1, 32>}, {transform_indices = @transform_6, window_bounds = array<i64: 1, 1>}, {transform_indices = @transform_7, window_bounds = array<i64: 1, 1, 8>}]} {
    %c0 = arith.constant 0 : index
    %c0_0 = arith.constant 0 : index
    %0 = vector.load %arg1[%c0, %c0_0] : memref<8x32xf32, #tpu.memory_space<vmem>>, vector<8x32xf32>
    %c0_1 = arith.constant 0 : index
    %c0_2 = arith.constant 0 : index
    %1 = vector.load %arg3[%c0_1, %c0_2] : memref<32x32xf32, #tpu.memory_space<vmem>>, vector<32x32xf32>
    %cst = arith.constant dense<0.000000e+00> : vector<8x32xf32>
    %2 = tpu.matmul %0, %1, %cst {dimension_numbers = #tpu.dot_dimension_numbers<[1], [0], [0], [1], [0, 0, 1, 1], [], []>} : vector<8x32xf32>, vector<32x32xf32>, vector<8x32xf32> -> vector<8x32xf32>
    %c0_3 = arith.constant 0 : index
    %c0_4 = arith.constant 0 : index
    %3 = vector.load %arg2[%c0_3, %c0_4] : memref<8x32xf32, #tpu.memory_space<vmem>>, vector<8x32xf32>
    %c0_5 = arith.constant 0 : index
    %c0_6 = arith.constant 0 : index
    %4 = vector.load %arg4[%c0_5, %c0_6] : memref<32x32xf32, #tpu.memory_space<vmem>>, vector<32x32xf32>
    %cst_7 = arith.constant dense<0.000000e+00> : vector<8x32xf32>
    %5 = tpu.matmul %3, %4, %cst_7 {dimension_numbers = #tpu.dot_dimension_numbers<[1], [0], [0], [1], [0, 0, 1, 1], [], []>} : vector<8x32xf32>, vector<32x32xf32>, vector<8x32xf32> -> vector<8x32xf32>
    %6 = arith.addf %2, %5 : vector<8x32xf32>
    %c0_8 = arith.constant 0 : index
    %c0_9 = arith.constant 0 : index
    %7 = vector.load %arg5[%c0_8, %c0_9] : memref<1x32xf32, #tpu.memory_space<vmem>>, vector<1x32xf32>
    %8 = vector.broadcast %7 : vector<1x32xf32> to vector<8x32xf32>
    %9 = arith.addf %6, %8 : vector<8x32xf32>
    %cst_10 = arith.constant 0.000000e+00 : f32
    %10 = vector.broadcast %cst_10 : f32 to vector<8x32xf32>
    %11 = arith.maximumf %9, %10 : vector<8x32xf32>
    %c0_11 = arith.constant 0 : index
    %c0_12 = arith.constant 0 : index
    %12 = vector.load %arg6[%c0_11, %c0_12] : memref<1x32xf32, #tpu.memory_space<vmem>>, vector<1x32xf32>
    %cst_13 = arith.constant dense<0.000000e+00> : vector<1x8xf32>
    %13 = tpu.matmul %12, %11, %cst_13 {dimension_numbers = #tpu.dot_dimension_numbers<[1], [1], [0], [0], [0, 0, 1, 0], [], []>} : vector<1x32xf32>, vector<8x32xf32>, vector<1x8xf32> -> vector<1x8xf32>
    %c0_14 = arith.constant 0 : index
    %c0_15 = arith.constant 0 : index
    %14 = memref.load %arg7[%c0_14, %c0_15] : memref<1x1xf32, #tpu.memory_space<smem>>
    %15 = vector.broadcast %14 : f32 to vector<1x8xf32>
    %16 = arith.addf %13, %15 : vector<1x8xf32>
    %17 = arith.negf %16 : vector<1x8xf32>
    %18 = math.exp %17 : vector<1x8xf32>
    %cst_16 = arith.constant 1.000000e+00 : f32
    %19 = vector.broadcast %cst_16 : f32 to vector<1x8xf32>
    %20 = arith.addf %19, %18 : vector<1x8xf32>
    %21 = arith.divf %19, %20 : vector<1x8xf32>
    %22 = vector.shape_cast %21 : vector<1x8xf32> to vector<1x1x8xf32>
    %c0_17 = arith.constant 0 : index
    %c0_18 = arith.constant 0 : index
    %c0_19 = arith.constant 0 : index
    %23 = vector.load %arg8[%c0_17, %c0_18, %c0_19] : memref<1x1x8xf32, #tpu.memory_space<vmem>>, vector<1x1x8xf32>
    tpu.vector_store %arg8[%c0_17, %c0_18, %c0_19], %22 {strides = array<i32>} : memref<1x1x8xf32, #tpu.memory_space<vmem>>, vector<1x1x8xf32>,
    return
  }
  func.func @transform_0(%arg0: i32) -> (i32, i32) {
    %c0_i32 = arith.constant 0 : i32
    %c0_i32_0 = arith.constant 0 : i32
    return %arg0, %c0_i32 : i32, i32
  }
  func.func @transform_1(%arg0: i32) -> (i32, i32) {
    %c0_i32 = arith.constant 0 : i32
    %c0_i32_0 = arith.constant 0 : i32
    return %arg0, %c0_i32 : i32, i32
  }
  func.func @transform_2(%arg0: i32) -> (i32, i32) {
    %c0_i32 = arith.constant 0 : i32
    %c0_i32_0 = arith.constant 0 : i32
    %c0_i32_1 = arith.constant 0 : i32
    return %c0_i32, %c0_i32_0 : i32, i32
  }
  func.func @transform_3(%arg0: i32) -> (i32, i32) {
    %c0_i32 = arith.constant 0 : i32
    %c0_i32_0 = arith.constant 0 : i32
    %c0_i32_1 = arith.constant 0 : i32
    return %c0_i32, %c0_i32_0 : i32, i32
  }
  func.func @transform_4(%arg0: i32) -> (i32, i32) {
    %c0_i32 = arith.constant 0 : i32
    %c0_i32_0 = arith.constant 0 : i32
    %c0_i32_1 = arith.constant 0 : i32
    return %c0_i32, %c0_i32_0 : i32, i32
  }
  func.func @transform_5(%arg0: i32) -> (i32, i32) {
    %c0_i32 = arith.constant 0 : i32
    %c0_i32_0 = arith.constant 0 : i32
    %c0_i32_1 = arith.constant 0 : i32
    return %c0_i32, %c0_i32_0 : i32, i32
  }
  func.func @transform_6(%arg0: i32) -> (i32, i32) {
    %c0_i32 = arith.constant 0 : i32
    %c0_i32_0 = arith.constant 0 : i32
    %c0_i32_1 = arith.constant 0 : i32
    return %c0_i32, %c0_i32_0 : i32, i32
  }
  func.func @transform_7(%arg0: i32) -> (i32, i32, i32) {
    %c0_i32 = arith.constant 0 : i32
    %c0_i32_0 = arith.constant 0 : i32
    %c0_i32_1 = arith.constant 0 : i32
    return %arg0, %c0_i32, %c0_i32_0 : i32, i32, i32
  }
}

</mosaic_0001>

<llo_original>
// kernel: tpu_custom_call.1
$region0: #{tpu_custom_call.1}
  #allocation0 [shape = 'u32[]', space=smem, size = 0x4, offset = 0x4, fixed_abs, tag = 'smem constant byte address 0x4 - core index']
  #allocation1 [shape = 'u32[144,128]{1,0:T(1,128)}', space=vmem, size = 0x12000, scoped, tag = 'internal scratch']
  #allocation2 [shape = 'f32[1,1]{1,0:T(1,128)S(6)}', space=smem, size = 0x200, scoped, tag = 'scoped memory for tpu_custom_call.1']
  %s0 = inlined_call_operand.hbm [shape: f32[8,32], index: 0, kind: input, shape index: {}]
  %s1 = inlined_call_operand.hbm [shape: f32[8,32], index: 1, kind: input, shape index: {}]
  %s2 = inlined_call_operand.hbm [shape: f32[32,32], index: 2, kind: input, shape index: {}]
  %s3 = inlined_call_operand.hbm [shape: f32[32,32], index: 3, kind: input, shape index: {}]
  %s4 = inlined_call_operand.vmem [shape: f32[1,32], index: 4, kind: input, shape index: {}]
  %s5 = inlined_call_operand.vmem [shape: f32[1,32], index: 5, kind: input, shape index: {}]
  %s6 = inlined_call_operand.<no memory space> [shape: f32[1,1], index: 6, kind: input, shape index: {}]
  %s7 = inlined_call_operand.hbm [shape: f32[1,1,8], index: 7, kind: output, shape index: {}]
  %s8 = sld [smem:[#allocation0]]
  $region54: #{tpu_custom_call.1} parent=0
    _
  %s10 = ssub.s32 1, %s8
  %s11 = scalar_select 0, %s10, %s8
  %12 = sst [smem:[#allocation2]] %s6
  $region1: #{tpu_custom_call.1} parent=0
    #allocation3 [shape = 'u8[4096]{0}', space=vmem, size = 0x1000, scoped, tag = 'input window, operand 0, single buffered']
    #allocation4 [shape = 's32[1]{0}', space=sflag, size = 0x4, scoped, tag = 'scoped memory for tpu_custom_call.1']
    #allocation5 [shape = 's32[1]{0}', space=sflag, size = 0x4, scoped, tag = 'scoped memory for tpu_custom_call.1']
    #allocation6 [shape = 'u8[4096]{0}', space=vmem, size = 0x1000, scoped, tag = 'input window, operand 1, single buffered']
    #allocation7 [shape = 's32[1]{0}', space=sflag, size = 0x4, scoped, tag = 'scoped memory for tpu_custom_call.1']
    #allocation8 [shape = 'u8[16384]{0}', space=vmem, size = 0x4000, scoped, tag = 'input window, operand 2, single buffered']
    #allocation9 [shape = 'u8[16384]{0}', space=vmem, size = 0x4000, scoped, tag = 'input window, operand 3, single buffered']
    #allocation10 [shape = 's32[1]{0}', space=sflag, size = 0x4, scoped, tag = 'scoped memory for tpu_custom_call.1']
    #allocation11 [shape = 'u8[512]{0}', space=vmem, size = 0x400, scoped, tag = 'output window, operand 0, single buffered']
    %13 = vsyncpa [#allocation4], 0
    %14 = vsyncpa [#allocation7], 0
    %15 = vsyncpa [#allocation10], 0
    %16 = vsyncpa [#allocation5], 0
    // Predicated region
    $region2: #{tpu_custom_call.1} parent=1 // pred_check
      _
    $region3: #{tpu_custom_call.1} parent=1 // pred_check_branch
      %18 = sbr.rel (0) target = $region5
    $region4: #{tpu_custom_call.1} parent=1 // pred_region
      %s20 = ssub.s32 128, 128
      %21 = vsyncadd [#allocation4], %s20
      %s23 = sshll.u32 [#allocation3], 4
      %s24 = int_to_ptr.vmem [resolvable:$true] %s23
      %26 = dma.hbm_to_vmem [thread:$0]  %s0, 128, %s24, [#allocation4]
    $region5: #{tpu_custom_call.1} parent=1 // pred_fallthru
      _
    // Predicated region
    $region6: #{tpu_custom_call.1} parent=1 // pred_check
      _
    $region7: #{tpu_custom_call.1} parent=1 // pred_check_branch
      %28 = sbr.rel (0) target = $region9
    $region8: #{tpu_custom_call.1} parent=1 // pred_region
      %s30 = ssub.s32 128, 128
      %31 = vsyncadd [#allocation7], %s30
      %s33 = sshll.u32 [#allocation6], 4
      %s34 = int_to_ptr.vmem [resolvable:$true] %s33
      %36 = dma.hbm_to_vmem [thread:$0]  %s1, 128, %s34, [#allocation7]
    $region9: #{tpu_custom_call.1} parent=1 // pred_fallthru
      _
    // Predicated region
    $region10: #{tpu_custom_call.1} parent=1 // pred_check
      _
    $region11: #{tpu_custom_call.1} parent=1 // pred_check_branch
      %38 = sbr.rel (0) target = $region13
    $region12: #{tpu_custom_call.1} parent=1 // pred_region
      %s40 = ssub.s32 512, 512
      %41 = vsyncadd [#allocation7], %s40
      %s42 = sshll.u32 [#allocation8], 4
      %s43 = int_to_ptr.vmem [resolvable:$true] %s42
      %48 = dma.hbm_to_vmem [thread:$0]  %s2, 512, %s43, [#allocation7], 128, 128, 8
    $region13: #{tpu_custom_call.1} parent=1 // pred_fallthru
      _
    // Predicated region
    $region14: #{tpu_custom_call.1} parent=1 // pred_check
      _
    $region15: #{tpu_custom_call.1} parent=1 // pred_check_branch
      %50 = sbr.rel (0) target = $region17
    $region16: #{tpu_custom_call.1} parent=1 // pred_region
      %s52 = ssub.s32 512, 512
      %53 = vsyncadd [#allocation10], %s52
      %s54 = sshll.u32 [#allocation9], 4
      %s55 = int_to_ptr.vmem [resolvable:$true] %s54
      %60 = dma.hbm_to_vmem [thread:$0]  %s3, 512, %s55, [#allocation10], 128, 128, 8
    $region17: #{tpu_custom_call.1} parent=1 // pred_fallthru
      _
    // Predicated region
    $region18: #{tpu_custom_call.1} parent=1 // pred_check
      _
    $region19: #{tpu_custom_call.1} parent=1 // pred_check_branch
      %62 = sbr.rel (0) target = $region21
    $region20: #{tpu_custom_call.1} parent=1 // pred_region
      _
    $region21: #{tpu_custom_call.1} parent=1 // pred_fallthru
      _
    // Predicated region
    $region22: #{tpu_custom_call.1} parent=1 // pred_check
      _
    $region23: #{tpu_custom_call.1} parent=1 // pred_check_branch
      %64 = sbr.rel (0) target = $region25
    $region24: #{tpu_custom_call.1} parent=1 // pred_region
      _
    $region25: #{tpu_custom_call.1} parent=1 // pred_fallthru
      _
    // Predicated region
    $region26: #{tpu_custom_call.1} parent=1 // pred_check
      _
    $region27: #{tpu_custom_call.1} parent=1 // pred_check_branch
      %66 = sbr.rel (0) target = $region29
    $region28: #{tpu_custom_call.1} parent=1 // pred_region
      _
    $region29: #{tpu_custom_call.1} parent=1 // pred_fallthru
      _
    // Predicated region
    $region30: #{tpu_custom_call.1} parent=1 // pred_check
      _
    $region31: #{tpu_custom_call.1} parent=1 // pred_check_branch
      %68 = sbr.rel (0) target = $region33
    $region32: #{tpu_custom_call.1} parent=1 // pred_region
      %69 = dma.done [#allocation4], 128
    $region33: #{tpu_custom_call.1} parent=1 // pred_fallthru
      _
    // Predicated region
    $region34: #{tpu_custom_call.1} parent=1 // pred_check
      _
    $region35: #{tpu_custom_call.1} parent=1 // pred_check_branch
      %71 = sbr.rel (0) target = $region37
    $region36: #{tpu_custom_call.1} parent=1 // pred_region
      %72 = dma.done [#allocation7], 128
    $region37: #{tpu_custom_call.1} parent=1 // pred_fallthru
      _
    // Predicated region
    $region38: #{tpu_custom_call.1} parent=1 // pred_check
      _
    $region39: #{tpu_custom_call.1} parent=1 // pred_check_branch
      %74 = sbr.rel (0) target = $region41
    $region40: #{tpu_custom_call.1} parent=1 // pred_region
      %75 = dma.done [#allocation7], 512
    $region41: #{tpu_custom_call.1} parent=1 // pred_fallthru
      _
    // Predicated region
    $region42: #{tpu_custom_call.1} parent=1 // pred_check
      _
    $region43: #{tpu_custom_call.1} parent=1 // pred_check_branch
      %77 = sbr.rel (0) target = $region45
    $region44: #{tpu_custom_call.1} parent=1 // pred_region
      %78 = dma.done [#allocation10], 512
    $region45: #{tpu_custom_call.1} parent=1 // pred_fallthru
      _
    %v79 = vld [vmem:[#allocation3] sm:$0xff]
    %v80 = vld [vmem:[#allocation8] sm:$0xff]
    %v81 = vld [vmem:[#allocation8 + $0x8] sm:$0xff]
    %v82 = vld [vmem:[#allocation8 + $0x10] sm:$0xff]
    %v83 = vld [vmem:[#allocation8 + $0x18] sm:$0xff]
    %v84 = vld [vmem:[#allocation6] sm:$0xff]
    %v85 = vld [vmem:[#allocation9] sm:$0xff]
    %v86 = vld [vmem:[#allocation9 + $0x8] sm:$0xff]
    %v87 = vld [vmem:[#allocation9 + $0x10] sm:$0xff]
    %v88 = vld [vmem:[#allocation9 + $0x18] sm:$0xff]
    %vm89 = vcmask 261120
    %v91 = vsel %vm89, %v84, 0
    %93 = vmatprep.subr.mxu0 0.0
    %94 = vmatpush1.msra.mxu0 0.0
    %95 = vmatprep.subr.mxu0 0.0
    %96 = vmatpush1.msra.mxu0 0.0
    %97 = vmatprep.subr.mxu0 0.0
    %98 = vmatpush1.msra.mxu0 0.0
    %99 = vmatprep.subr.mxu0 0.0
    %100 = vmatpush1.msra.mxu0 0.0
    %101 = vmatprep.subr.mxu0 0.0
    %102 = vmatpush1.msra.mxu0 0.0
    %103 = vmatprep.subr.mxu0 0.0
    %104 = vmatpush1.msra.mxu0 0.0
    %105 = vmatprep.subr.mxu0 0.0
    %106 = vmatpush1.msra.mxu0 0.0
    %107 = vmatprep.subr.mxu0 0.0
    %108 = vmatpush1.msra.mxu0 0.0
    %109 = vmatprep.subr.mxu0 0.0
    %110 = vmatpush1.msra.mxu0 0.0
    %111 = vmatprep.subr.mxu0 0.0
    %112 = vmatpush1.msra.mxu0 0.0
    %113 = vmatprep.subr.mxu0 0.0
    %114 = vmatpush1.msra.mxu0 0.0
    %115 = vmatprep.subr.mxu0 0.0
    %116 = vmatpush1.msra.mxu0 0.0
    %117 = vmatprep.subr.mxu0 0.0
    %118 = vmatpush1.msra.mxu0 %v88
    %119 = vmatprep.subr.mxu0 0.0
    %120 = vmatpush1.msra.mxu0 %v87
    %121 = vmatprep.subr.mxu0 0.0
    %122 = vmatpush1.msra.mxu0 %v86
    %123 = vmatprep.subr.mxu0 0.0
    %124 = vmatpush1.msra.mxu0 %v85
    %125 = vmatprep.subr.mxu0 0.0
    %126 = vmatpush2.msra.mxu0 0.0
    %127 = vmatprep.subr.mxu0 0.0
    %128 = vmatpush2.msra.mxu0 0.0
    %129 = vmatprep.subr.mxu0 0.0
    %130 = vmatpush2.msra.mxu0 0.0
    %131 = vmatprep.subr.mxu0 0.0
    %132 = vmatpush2.msra.mxu0 0.0
    %133 = vmatprep.subr.mxu0 0.0
    %134 = vmatpush2.msra.mxu0 0.0
    %135 = vmatprep.subr.mxu0 0.0
    %136 = vmatpush2.msra.mxu0 0.0
    %137 = vmatprep.subr.mxu0 0.0
    %138 = vmatpush2.msra.mxu0 0.0
    %139 = vmatprep.subr.mxu0 0.0
    %140 = vmatpush2.msra.mxu0 0.0
    %141 = vmatprep.subr.mxu0 0.0
    %142 = vmatpush2.msra.mxu0 0.0
    %143 = vmatprep.subr.mxu0 0.0
    %144 = vmatpush2.msra.mxu0 0.0
    %145 = vmatprep.subr.mxu0 0.0
    %146 = vmatpush2.msra.mxu0 0.0
    %147 = vmatprep.subr.mxu0 0.0
    %148 = vmatpush2.msra.mxu0 0.0
    %149 = vmatprep.subr.mxu0 0.0
    %150 = vmatpush2.msra.mxu0 0.0
    %151 = vmatprep.subr.mxu0 0.0
    %152 = vmatpush2.msra.mxu0 0.0
    %153 = vmatprep.subr.mxu0 0.0
    %154 = vmatpush2.msra.mxu0 0.0
    %155 = vmatprep.subr.mxu0 0.0
    %156 = vmatpush2.msra.mxu0 0.0
    %157 = vmatprep.mubr.f32.mxu0 0.0
    %158 = vmatmul.mubr.f32.gmra.mxu0 %v91
    %v159 = vpop.f32.mrf.mxu0
    %v160 = vadd.f32 0.0, %v159
    %v161 = vpop.f32.mrf.mxu0
    %162 = vdwg.mxu0
    %v164 = vsel %vm89, %v79, 0
    %166 = vmatprep.subr.mxu0 0.0
    %167 = vmatpush1.msra.mxu0 0.0
    %168 = vmatprep.subr.mxu0 0.0
    %169 = vmatpush1.msra.mxu0 0.0
    %170 = vmatprep.subr.mxu0 0.0
    %171 = vmatpush1.msra.mxu0 0.0
    %172 = vmatprep.subr.mxu0 0.0
    %173 = vmatpush1.msra.mxu0 0.0
    %174 = vmatprep.subr.mxu0 0.0
    %175 = vmatpush1.msra.mxu0 0.0
    %176 = vmatprep.subr.mxu0 0.0
    %177 = vmatpush1.msra.mxu0 0.0
    %178 = vmatprep.subr.mxu0 0.0
    %179 = vmatpush1.msra.mxu0 0.0
    %180 = vmatprep.subr.mxu0 0.0
    %181 = vmatpush1.msra.mxu0 0.0
    %182 = vmatprep.subr.mxu0 0.0
    %183 = vmatpush1.msra.mxu0 0.0
    %184 = vmatprep.subr.mxu0 0.0
    %185 = vmatpush1.msra.mxu0 0.0
    %186 = vmatprep.subr.mxu0 0.0
    %187 = vmatpush1.msra.mxu0 0.0
    %188 = vmatprep.subr.mxu0 0.0
    %189 = vmatpush1.msra.mxu0 0.0
    %190 = vmatprep.subr.mxu0 0.0
    %191 = vmatpush1.msra.mxu0 %v83
    %192 = vmatprep.subr.mxu0 0.0
    %193 = vmatpush1.msra.mxu0 %v82
    %194 = vmatprep.subr.mxu0 0.0
    %195 = vmatpush1.msra.mxu0 %v81
    %196 = vmatprep.subr.mxu0 0.0
    %197 = vmatpush1.msra.mxu0 %v80
    %198 = vmatprep.subr.mxu0 0.0
    %199 = vmatpush2.msra.mxu0 0.0
    %200 = vmatprep.subr.mxu0 0.0
    %201 = vmatpush2.msra.mxu0 0.0
    %202 = vmatprep.subr.mxu0 0.0
    %203 = vmatpush2.msra.mxu0 0.0
    %204 = vmatprep.subr.mxu0 0.0
    %205 = vmatpush2.msra.mxu0 0.0
    %206 = vmatprep.subr.mxu0 0.0
    %207 = vmatpush2.msra.mxu0 0.0
    %208 = vmatprep.subr.mxu0 0.0
    %209 = vmatpush2.msra.mxu0 0.0
    %210 = vmatprep.subr.mxu0 0.0
    %211 = vmatpush2.msra.mxu0 0.0
    %212 = vmatprep.subr.mxu0 0.0
    %213 = vmatpush2.msra.mxu0 0.0
    %214 = vmatprep.subr.mxu0 0.0
    %215 = vmatpush2.msra.mxu0 0.0
    %216 = vmatprep.subr.mxu0 0.0
    %217 = vmatpush2.msra.mxu0 0.0
    %218 = vmatprep.subr.mxu0 0.0
    %219 = vmatpush2.msra.mxu0 0.0
    %220 = vmatprep.subr.mxu0 0.0
    %221 = vmatpush2.msra.mxu0 0.0
    %222 = vmatprep.subr.mxu0 0.0
    %223 = vmatpush2.msra.mxu0 0.0
    %224 = vmatprep.subr.mxu0 0.0
    %225 = vmatpush2.msra.mxu0 0.0
    %226 = vmatprep.subr.mxu0 0.0
    %227 = vmatpush2.msra.mxu0 0.0
    %228 = vmatprep.subr.mxu0 0.0
    %229 = vmatpush2.msra.mxu0 0.0
    %230 = vmatprep.mubr.f32.mxu0 0.0
    %231 = vmatmul.mubr.f32.gmra.mxu0 %v164
    %v232 = vpop.f32.mrf.mxu0
    %v233 = vadd.f32 %v160, %v232
    %v234 = vpop.f32.mrf.mxu0
    %235 = vdwg.mxu0
    %v236 = vld [vmem:[%s4] sm:$0x1]
    %v238 = vlaneseq
    %v239 = vshrl.u32 %v238, 7
    %v240 = vsub.s32 0, %v239
    %v241 = vrot.slane %v236, %v240
    %v243 = vadd.f32 %v233, %v241
    %v244 = vmax.f32 %v243, 0.0
    %v245 = vld [vmem:[%s5] sm:$0x1]
    %s246 = sld [smem:[#allocation2]]
    %v247 = vstv %s246
    %v249 = vsel %vm89, %v245, 0
    %v252 = vsel %vm89, %v244, 0
    %254 = vmatprep.subr.mxu0 0.0
    %255 = vmatpush1.xpose.msra.mxu0 0.0
    %256 = vmatprep.subr.mxu0 0.0
    %257 = vmatpush1.xpose.msra.mxu0 0.0
    %258 = vmatprep.subr.mxu0 0.0
    %259 = vmatpush1.xpose.msra.mxu0 0.0
    %260 = vmatprep.subr.mxu0 0.0
    %261 = vmatpush1.xpose.msra.mxu0 0.0
    %262 = vmatprep.subr.mxu0 0.0
    %263 = vmatpush1.xpose.msra.mxu0 0.0
    %264 = vmatprep.subr.mxu0 0.0
    %265 = vmatpush1.xpose.msra.mxu0 0.0
    %266 = vmatprep.subr.mxu0 0.0
    %267 = vmatpush1.xpose.msra.mxu0 0.0
    %268 = vmatprep.subr.mxu0 0.0
    %269 = vmatpush1.xpose.msra.mxu0 0.0
    %270 = vmatprep.subr.mxu0 0.0
    %271 = vmatpush1.xpose.msra.mxu0 0.0
    %272 = vmatprep.subr.mxu0 0.0
    %273 = vmatpush1.xpose.msra.mxu0 0.0
    %274 = vmatprep.subr.mxu0 0.0
    %275 = vmatpush1.xpose.msra.mxu0 0.0
    %276 = vmatprep.subr.mxu0 0.0
    %277 = vmatpush1.xpose.msra.mxu0 0.0
    %278 = vmatprep.subr.mxu0 0.0
    %279 = vmatpush1.xpose.msra.mxu0 0.0
    %280 = vmatprep.subr.mxu0 0.0
    %281 = vmatpush1.xpose.msra.mxu0 0.0
    %282 = vmatprep.subr.mxu0 0.0
    %283 = vmatpush1.xpose.msra.mxu0 0.0
    %284 = vmatprep.subr.mxu0 0.0
    %285 = vmatpush1.xpose.msra.mxu0 %v252
    %286 = vmatprep.subr.mxu0 0.0
    %287 = vmatpush2.xpose.msra.mxu0 0.0
    %288 = vmatprep.subr.mxu0 0.0
    %289 = vmatpush2.xpose.msra.mxu0 0.0
    %290 = vmatprep.subr.mxu0 0.0
    %291 = vmatpush2.xpose.msra.mxu0 0.0
    %292 = vmatprep.subr.mxu0 0.0
    %293 = vmatpush2.xpose.msra.mxu0 0.0
    %294 = vmatprep.subr.mxu0 0.0
    %295 = vmatpush2.xpose.msra.mxu0 0.0
    %296 = vmatprep.subr.mxu0 0.0
    %297 = vmatpush2.xpose.msra.mxu0 0.0
    %298 = vmatprep.subr.mxu0 0.0
    %299 = vmatpush2.xpose.msra.mxu0 0.0
    %300 = vmatprep.subr.mxu0 0.0
    %301 = vmatpush2.xpose.msra.mxu0 0.0
    %302 = vmatprep.subr.mxu0 0.0
    %303 = vmatpush2.xpose.msra.mxu0 0.0
    %304 = vmatprep.subr.mxu0 0.0
    %305 = vmatpush2.xpose.msra.mxu0 0.0
    %306 = vmatprep.subr.mxu0 0.0
    %307 = vmatpush2.xpose.msra.mxu0 0.0
    %308 = vmatprep.subr.mxu0 0.0
    %309 = vmatpush2.xpose.msra.mxu0 0.0
    %310 = vmatprep.subr.mxu0 0.0
    %311 = vmatpush2.xpose.msra.mxu0 0.0
    %312 = vmatprep.subr.mxu0 0.0
    %313 = vmatpush2.xpose.msra.mxu0 0.0
    %314 = vmatprep.subr.mxu0 0.0
    %315 = vmatpush2.xpose.msra.mxu0 0.0
    %316 = vmatprep.subr.mxu0 0.0
    %317 = vmatpush2.xpose.msra.mxu0 0.0
    %318 = vmatprep.mubr.f32.mxu0 0.0
    %319 = vmatmul.mubr.f32.gmra.mxu0 %v249
    %v320 = vpop.f32.mrf.mxu0
    %v321 = vadd.f32 %v247, %v320
    %v322 = vpop.f32.mrf.mxu0
    %323 = vdwg.mxu0
    %v324 = vxor.u32 %v321, 2147483648
    %v325 = vmul.f32 %v324, 1.442695
    %v326 = vpow.pop %v325
    %v327 = vadd.f32 %v326, 1.0
    %v328 = vrcp.pop %v327
    %v329 = vmul.f32 1.0, %v328
    %vm330 = vcmask 57344
    %331 = vst.msk [vmem:[#allocation11] sm:$0x1] %vm330, %v329
    // Predicated region
    $region46: #{tpu_custom_call.1} parent=1 // pred_check
      _
    $region47: #{tpu_custom_call.1} parent=1 // pred_check_branch
      %333 = sbr.rel (0) target = $region49
    $region48: #{tpu_custom_call.1} parent=1 // pred_region
      %s335 = ssub.s32 16, 16
      %336 = vsyncadd [#allocation5], %s335
      %s338 = sshll.u32 [#allocation11], 4
      %s339 = int_to_ptr.vmem [resolvable:$true] %s338
      %341 = dma.vmem_to_hbm [thread:$0]  %s339, 16, %s7, [#allocation5]
    $region49: #{tpu_custom_call.1} parent=1 // pred_fallthru
      _
    // Predicated region
    $region50: #{tpu_custom_call.1} parent=1 // pred_check
      _
    $region51: #{tpu_custom_call.1} parent=1 // pred_check_branch
      %343 = sbr.rel (0) target = $region53
    $region52: #{tpu_custom_call.1} parent=1 // pred_region
      %344 = dma.done [#allocation5], 16
    $region53: #{tpu_custom_call.1} parent=1 // pred_fallthru
      _
    %345 = vsyncpa [#allocation4], 1
    %346 = vsyncpa [#allocation7], 1
    %347 = vsyncpa [#allocation10], 1
    %348 = vsyncpa [#allocation5], 1

// kernel: tpu_custom_call.1
$region0: #{tpu_custom_call.1}
  #allocation0 [shape = 'u32[]', space=smem, size = 0x4, offset = 0x4, fixed_abs, tag = 'smem constant byte address 0x4 - core index']
  #allocation1 [shape = 'u32[144,128]{1,0:T(1,128)}', space=vmem, size = 0x12000, scoped, tag = 'internal scratch']
  #allocation2 [shape = 'f32[1,1]{1,0:T(1,128)S(6)}', space=smem, size = 0x200, scoped, tag = 'scoped memory for tpu_custom_call.1']
  %s0 = inlined_call_operand.hbm [shape: f32[8,32], index: 0, kind: input, shape index: {}]
  %s1 = inlined_call_operand.hbm [shape: f32[8,32], index: 1, kind: input, shape index: {}]
  %s2 = inlined_call_operand.hbm [shape: f32[32,32], index: 2, kind: input, shape index: {}]
  %s3 = inlined_call_operand.hbm [shape: f32[32,32], index: 3, kind: input, shape index: {}]
  %s4 = inlined_call_operand.vmem [shape: f32[1,32], index: 4, kind: input, shape index: {}]
  %s5 = inlined_call_operand.vmem [shape: f32[1,32], index: 5, kind: input, shape index: {}]
  %s6 = inlined_call_operand.<no memory space> [shape: f32[1,1], index: 6, kind: input, shape index: {}]
  %s7 = inlined_call_operand.hbm [shape: f32[1,1,8], index: 7, kind: output, shape index: {}]
  %s8 = sld [smem:[#allocation0]]
  $region54: #{tpu_custom_call.1} parent=0
    _
  %s10 = ssub.s32 1, %s8
  %s11 = scalar_select 0, %s10, %s8
  %12 = sst [smem:[#allocation2]] %s6
  $region1: #{tpu_custom_call.1} parent=0
    #allocation3 [shape = 'u8[4096]{0}', space=vmem, size = 0x1000, scoped, tag = 'input window, operand 0, single buffered']
    #allocation4 [shape = 's32[1]{0}', space=sflag, size = 0x4, scoped, tag = 'scoped memory for tpu_custom_call.1']
    #allocation5 [shape = 's32[1]{0}', space=sflag, size = 0x4, scoped, tag = 'scoped memory for tpu_custom_call.1']
    #allocation6 [shape = 'u8[4096]{0}', space=vmem, size = 0x1000, scoped, tag = 'input window, operand 1, single buffered']
    #allocation7 [shape = 's32[1]{0}', space=sflag, size = 0x4, scoped, tag = 'scoped memory for tpu_custom_call.1']
    #allocation8 [shape = 'u8[16384]{0}', space=vmem, size = 0x4000, scoped, tag = 'input window, operand 2, single buffered']
    #allocation9 [shape = 'u8[16384]{0}', space=vmem, size = 0x4000, scoped, tag = 'input window, operand 3, single buffered']
    #allocation10 [shape = 's32[1]{0}', space=sflag, size = 0x4, scoped, tag = 'scoped memory for tpu_custom_call.1']
    #allocation11 [shape = 'u8[512]{0}', space=vmem, size = 0x400, scoped, tag = 'output window, operand 0, single buffered']
    %13 = vsyncpa [#allocation4], 0
    %14 = vsyncpa [#allocation7], 0
    %15 = vsyncpa [#allocation10], 0
    %16 = vsyncpa [#allocation5], 0
    // Predicated region
    $region2: #{tpu_custom_call.1} parent=1 // pred_check
      _
    $region3: #{tpu_custom_call.1} parent=1 // pred_check_branch
      %18 = sbr.rel (0) target = $region5
    $region4: #{tpu_custom_call.1} parent=1 // pred_region
      %s20 = ssub.s32 128, 128
      %21 = vsyncadd [#allocation4], %s20
      %s23 = sshll.u32 [#allocation3], 4
      %s24 = int_to_ptr.vmem [resolvable:$true] %s23
      %26 = dma.hbm_to_vmem [thread:$0]  %s0, 128, %s24, [#allocation4]
    $region5: #{tpu_custom_call.1} parent=1 // pred_fallthru
      _
    // Predicated region
    $region6: #{tpu_custom_call.1} parent=1 // pred_check
      _
    $region7: #{tpu_custom_call.1} parent=1 // pred_check_branch
      %28 = sbr.rel (0) target = $region9
    $region8: #{tpu_custom_call.1} parent=1 // pred_region
      %s30 = ssub.s32 128, 128
      %31 = vsyncadd [#allocation7], %s30
      %s33 = sshll.u32 [#allocation6], 4
      %s34 = int_to_ptr.vmem [resolvable:$true] %s33
      %36 = dma.hbm_to_vmem [thread:$0]  %s1, 128, %s34, [#allocation7]
    $region9: #{tpu_custom_call.1} parent=1 // pred_fallthru
      _
    // Predicated region
    $region10: #{tpu_custom_call.1} parent=1 // pred_check
      _
    $region11: #{tpu_custom_call.1} parent=1 // pred_check_branch
      %38 = sbr.rel (0) target = $region13
    $region12: #{tpu_custom_call.1} parent=1 // pred_region
      %s40 = ssub.s32 512, 512
      %41 = vsyncadd [#allocation7], %s40
      %s42 = sshll.u32 [#allocation8], 4
      %s43 = int_to_ptr.vmem [resolvable:$true] %s42
      %48 = dma.hbm_to_vmem [thread:$0]  %s2, 512, %s43, [#allocation7], 128, 128, 8
    $region13: #{tpu_custom_call.1} parent=1 // pred_fallthru
      _
    // Predicated region
    $region14: #{tpu_custom_call.1} parent=1 // pred_check
      _
    $region15: #{tpu_custom_call.1} parent=1 // pred_check_branch
      %50 = sbr.rel (0) target = $region17
    $region16: #{tpu_custom_call.1} parent=1 // pred_region
      %s52 = ssub.s32 512, 512
      %53 = vsyncadd [#allocation10], %s52
      %s54 = sshll.u32 [#allocation9], 4
      %s55 = int_to_ptr.vmem [resolvable:$true] %s54
      %60 = dma.hbm_to_vmem [thread:$0]  %s3, 512, %s55, [#allocation10], 128, 128, 8
    $region17: #{tpu_custom_call.1} parent=1 // pred_fallthru
      _
    // Predicated region
    $region18: #{tpu_custom_call.1} parent=1 // pred_check
      _
    $region19: #{tpu_custom_call.1} parent=1 // pred_check_branch
      %62 = sbr.rel (0) target = $region21
    $region20: #{tpu_custom_call.1} parent=1 // pred_region
      _
    $region21: #{tpu_custom_call.1} parent=1 // pred_fallthru
      _
    // Predicated region
    $region22: #{tpu_custom_call.1} parent=1 // pred_check
      _
    $region23: #{tpu_custom_call.1} parent=1 // pred_check_branch
      %64 = sbr.rel (0) target = $region25
    $region24: #{tpu_custom_call.1} parent=1 // pred_region
      _
    $region25: #{tpu_custom_call.1} parent=1 // pred_fallthru
      _
    // Predicated region
    $region26: #{tpu_custom_call.1} parent=1 // pred_check
      _
    $region27: #{tpu_custom_call.1} parent=1 // pred_check_branch
      %66 = sbr.rel (0) target = $region29
    $region28: #{tpu_custom_call.1} parent=1 // pred_region
      _
    $region29: #{tpu_custom_call.1} parent=1 // pred_fallthru
      _
    // Predicated region
    $region30: #{tpu_custom_call.1} parent=1 // pred_check
      _
    $region31: #{tpu_custom_call.1} parent=1 // pred_check_branch
      %68 = sbr.rel (0) target = $region33
    $region32: #{tpu_custom_call.1} parent=1 // pred_region
      %69 = dma.done [#allocation4], 128
    $region33: #{tpu_custom_call.1} parent=1 // pred_fallthru
      _
    // Predicated region
    $region34: #{tpu_custom_call.1} parent=1 // pred_check
      _
    $region35: #{tpu_custom_call.1} parent=1 // pred_check_branch
      %71 = sbr.rel (0) target = $region37
    $region36: #{tpu_custom_call.1} parent=1 // pred_region
      %72 = dma.done [#allocation7], 128
    $region37: #{tpu_custom_call.1} parent=1 // pred_fallthru
      _
    // Predicated region
    $region38: #{tpu_custom_call.1} parent=1 // pred_check
      _
    $region39: #{tpu_custom_call.1} parent=1 // pred_check_branch
      %74 = sbr.rel (0) target = $region41
    $region40: #{tpu_custom_call.1} parent=1 // pred_region
      %75 = dma.done [#allocation7], 512
    $region41: #{tpu_custom_call.1} parent=1 // pred_fallthru
      _
    // Predicated region
    $region42: #{tpu_custom_call.1} parent=1 // pred_check
      _
    $region43: #{tpu_custom_call.1} parent=1 // pred_check_branch
      %77 = sbr.rel (0) target = $region45
    $region44: #{tpu_custom_call.1} parent=1 // pred_region
      %78 = dma.done [#allocation10], 512
    $region45: #{tpu_custom_call.1} parent=1 // pred_fallthru
      _
    %v79 = vld [vmem:[#allocation3] sm:$0xff]
    %v80 = vld [vmem:[#allocation8] sm:$0xff]
    %v81 = vld [vmem:[#allocation8 + $0x8] sm:$0xff]
    %v82 = vld [vmem:[#allocation8 + $0x10] sm:$0xff]
    %v83 = vld [vmem:[#allocation8 + $0x18] sm:$0xff]
    %v84 = vld [vmem:[#allocation6] sm:$0xff]
    %v85 = vld [vmem:[#allocation9] sm:$0xff]
    %v86 = vld [vmem:[#allocation9 + $0x8] sm:$0xff]
    %v87 = vld [vmem:[#allocation9 + $0x10] sm:$0xff]
    %v88 = vld [vmem:[#allocation9 + $0x18] sm:$0xff]
    %vm89 = vcmask 261120
    %v91 = vsel %vm89, %v84, 0
    %93 = vmatprep.subr.mxu0 0.0
    %94 = vmatpush1.msra.mxu0 0.0
    %95 = vmatprep.subr.mxu0 0.0
    %96 = vmatpush1.msra.mxu0 0.0
    %97 = vmatprep.subr.mxu0 0.0
    %98 = vmatpush1.msra.mxu0 0.0
    %99 = vmatprep.subr.mxu0 0.0
    %100 = vmatpush1.msra.mxu0 0.0
    %101 = vmatprep.subr.mxu0 0.0
    %102 = vmatpush1.msra.mxu0 0.0
    %103 = vmatprep.subr.mxu0 0.0
    %104 = vmatpush1.msra.mxu0 0.0
    %105 = vmatprep.subr.mxu0 0.0
    %106 = vmatpush1.msra.mxu0 0.0
    %107 = vmatprep.subr.mxu0 0.0
    %108 = vmatpush1.msra.mxu0 0.0
    %109 = vmatprep.subr.mxu0 0.0
    %110 = vmatpush1.msra.mxu0 0.0
    %111 = vmatprep.subr.mxu0 0.0
    %112 = vmatpush1.msra.mxu0 0.0
    %113 = vmatprep.subr.mxu0 0.0
    %114 = vmatpush1.msra.mxu0 0.0
    %115 = vmatprep.subr.mxu0 0.0
    %116 = vmatpush1.msra.mxu0 0.0
    %117 = vmatprep.subr.mxu0 0.0
    %118 = vmatpush1.msra.mxu0 %v88
    %119 = vmatprep.subr.mxu0 0.0
    %120 = vmatpush1.msra.mxu0 %v87
    %121 = vmatprep.subr.mxu0 0.0
    %122 = vmatpush1.msra.mxu0 %v86
    %123 = vmatprep.subr.mxu0 0.0
    %124 = vmatpush1.msra.mxu0 %v85
    %125 = vmatprep.subr.mxu0 0.0
    %126 = vmatpush2.msra.mxu0 0.0
    %127 = vmatprep.subr.mxu0 0.0
    %128 = vmatpush2.msra.mxu0 0.0
    %129 = vmatprep.subr.mxu0 0.0
    %130 = vmatpush2.msra.mxu0 0.0
    %131 = vmatprep.subr.mxu0 0.0
    %132 = vmatpush2.msra.mxu0 0.0
    %133 = vmatprep.subr.mxu0 0.0
    %134 = vmatpush2.msra.mxu0 0.0
    %135 = vmatprep.subr.mxu0 0.0
    %136 = vmatpush2.msra.mxu0 0.0
    %137 = vmatprep.subr.mxu0 0.0
    %138 = vmatpush2.msra.mxu0 0.0
    %139 = vmatprep.subr.mxu0 0.0
    %140 = vmatpush2.msra.mxu0 0.0
    %141 = vmatprep.subr.mxu0 0.0
    %142 = vmatpush2.msra.mxu0 0.0
    %143 = vmatprep.subr.mxu0 0.0
    %144 = vmatpush2.msra.mxu0 0.0
    %145 = vmatprep.subr.mxu0 0.0
    %146 = vmatpush2.msra.mxu0 0.0
    %147 = vmatprep.subr.mxu0 0.0
    %148 = vmatpush2.msra.mxu0 0.0
    %149 = vmatprep.subr.mxu0 0.0
    %150 = vmatpush2.msra.mxu0 0.0
    %151 = vmatprep.subr.mxu0 0.0
    %152 = vmatpush2.msra.mxu0 0.0
    %153 = vmatprep.subr.mxu0 0.0
    %154 = vmatpush2.msra.mxu0 0.0
    %155 = vmatprep.subr.mxu0 0.0
    %156 = vmatpush2.msra.mxu0 0.0
    %157 = vmatprep.mubr.f32.mxu0 0.0
    %158 = vmatmul.mubr.f32.gmra.mxu0 %v91
    %v159 = vpop.f32.mrf.mxu0
    %v160 = vadd.f32 0.0, %v159
    %v161 = vpop.f32.mrf.mxu0
    %162 = vdwg.mxu0
    %v164 = vsel %vm89, %v79, 0
    %166 = vmatprep.subr.mxu0 0.0
    %167 = vmatpush1.msra.mxu0 0.0
    %168 = vmatprep.subr.mxu0 0.0
    %169 = vmatpush1.msra.mxu0 0.0
    %170 = vmatprep.subr.mxu0 0.0
    %171 = vmatpush1.msra.mxu0 0.0
    %172 = vmatprep.subr.mxu0 0.0
    %173 = vmatpush1.msra.mxu0 0.0
    %174 = vmatprep.subr.mxu0 0.0
    %175 = vmatpush1.msra.mxu0 0.0
    %176 = vmatprep.subr.mxu0 0.0
    %177 = vmatpush1.msra.mxu0 0.0
    %178 = vmatprep.subr.mxu0 0.0
    %179 = vmatpush1.msra.mxu0 0.0
    %180 = vmatprep.subr.mxu0 0.0
    %181 = vmatpush1.msra.mxu0 0.0
    %182 = vmatprep.subr.mxu0 0.0
    %183 = vmatpush1.msra.mxu0 0.0
    %184 = vmatprep.subr.mxu0 0.0
    %185 = vmatpush1.msra.mxu0 0.0
    %186 = vmatprep.subr.mxu0 0.0
    %187 = vmatpush1.msra.mxu0 0.0
    %188 = vmatprep.subr.mxu0 0.0
    %189 = vmatpush1.msra.mxu0 0.0
    %190 = vmatprep.subr.mxu0 0.0
    %191 = vmatpush1.msra.mxu0 %v83
    %192 = vmatprep.subr.mxu0 0.0
    %193 = vmatpush1.msra.mxu0 %v82
    %194 = vmatprep.subr.mxu0 0.0
    %195 = vmatpush1.msra.mxu0 %v81
    %196 = vmatprep.subr.mxu0 0.0
    %197 = vmatpush1.msra.mxu0 %v80
    %198 = vmatprep.subr.mxu0 0.0
    %199 = vmatpush2.msra.mxu0 0.0
    %200 = vmatprep.subr.mxu0 0.0
    %201 = vmatpush2.msra.mxu0 0.0
    %202 = vmatprep.subr.mxu0 0.0
    %203 = vmatpush2.msra.mxu0 0.0
    %204 = vmatprep.subr.mxu0 0.0
    %205 = vmatpush2.msra.mxu0 0.0
    %206 = vmatprep.subr.mxu0 0.0
    %207 = vmatpush2.msra.mxu0 0.0
    %208 = vmatprep.subr.mxu0 0.0
    %209 = vmatpush2.msra.mxu0 0.0
    %210 = vmatprep.subr.mxu0 0.0
    %211 = vmatpush2.msra.mxu0 0.0
    %212 = vmatprep.subr.mxu0 0.0
    %213 = vmatpush2.msra.mxu0 0.0
    %214 = vmatprep.subr.mxu0 0.0
    %215 = vmatpush2.msra.mxu0 0.0
    %216 = vmatprep.subr.mxu0 0.0
    %217 = vmatpush2.msra.mxu0 0.0
    %218 = vmatprep.subr.mxu0 0.0
    %219 = vmatpush2.msra.mxu0 0.0
    %220 = vmatprep.subr.mxu0 0.0
    %221 = vmatpush2.msra.mxu0 0.0
    %222 = vmatprep.subr.mxu0 0.0
    %223 = vmatpush2.msra.mxu0 0.0
    %224 = vmatprep.subr.mxu0 0.0
    %225 = vmatpush2.msra.mxu0 0.0
    %226 = vmatprep.subr.mxu0 0.0
    %227 = vmatpush2.msra.mxu0 0.0
    %228 = vmatprep.subr.mxu0 0.0
    %229 = vmatpush2.msra.mxu0 0.0
    %230 = vmatprep.mubr.f32.mxu0 0.0
    %231 = vmatmul.mubr.f32.gmra.mxu0 %v164
    %v232 = vpop.f32.mrf.mxu0
    %v233 = vadd.f32 %v160, %v232
    %v234 = vpop.f32.mrf.mxu0
    %235 = vdwg.mxu0
    %v236 = vld [vmem:[%s4] sm:$0x1]
    %v238 = vlaneseq
    %v239 = vshrl.u32 %v238, 7
    %v240 = vsub.s32 0, %v239
    %v241 = vrot.slane %v236, %v240
    %v243 = vadd.f32 %v233, %v241
    %v244 = vmax.f32 %v243, 0.0
    %v245 = vld [vmem:[%s5] sm:$0x1]
    %s246 = sld [smem:[#allocation2]]
    %v247 = vstv %s246
    %v249 = vsel %vm89, %v245, 0
    %v252 = vsel %vm89, %v244, 0
    %254 = vmatprep.subr.mxu0 0.0
    %255 = vmatpush1.xpose.msra.mxu0 0.0
    %256 = vmatprep.subr.mxu0 0.0
    %257 = vmatpush1.xpose.msra.mxu0 0.0
    %258 = vmatprep.subr.mxu0 0.0
    %259 = vmatpush1.xpose.msra.mxu0 0.0
    %260 = vmatprep.subr.mxu0 0.0
    %261 = vmatpush1.xpose.msra.mxu0 0.0
    %262 = vmatprep.subr.mxu0 0.0
    %263 = vmatpush1.xpose.msra.mxu0 0.0
    %264 = vmatprep.subr.mxu0 0.0
    %265 = vmatpush1.xpose.msra.mxu0 0.0
    %266 = vmatprep.subr.mxu0 0.0
    %267 = vmatpush1.xpose.msra.mxu0 0.0
    %268 = vmatprep.subr.mxu0 0.0
    %269 = vmatpush1.xpose.msra.mxu0 0.0
    %270 = vmatprep.subr.mxu0 0.0
    %271 = vmatpush1.xpose.msra.mxu0 0.0
    %272 = vmatprep.subr.mxu0 0.0
    %273 = vmatpush1.xpose.msra.mxu0 0.0
    %274 = vmatprep.subr.mxu0 0.0
    %275 = vmatpush1.xpose.msra.mxu0 0.0
    %276 = vmatprep.subr.mxu0 0.0
    %277 = vmatpush1.xpose.msra.mxu0 0.0
    %278 = vmatprep.subr.mxu0 0.0
    %279 = vmatpush1.xpose.msra.mxu0 0.0
    %280 = vmatprep.subr.mxu0 0.0
    %281 = vmatpush1.xpose.msra.mxu0 0.0
    %282 = vmatprep.subr.mxu0 0.0
    %283 = vmatpush1.xpose.msra.mxu0 0.0
    %284 = vmatprep.subr.mxu0 0.0
    %285 = vmatpush1.xpose.msra.mxu0 %v252
    %286 = vmatprep.subr.mxu0 0.0
    %287 = vmatpush2.xpose.msra.mxu0 0.0
    %288 = vmatprep.subr.mxu0 0.0
    %289 = vmatpush2.xpose.msra.mxu0 0.0
    %290 = vmatprep.subr.mxu0 0.0
    %291 = vmatpush2.xpose.msra.mxu0 0.0
    %292 = vmatprep.subr.mxu0 0.0
    %293 = vmatpush2.xpose.msra.mxu0 0.0
    %294 = vmatprep.subr.mxu0 0.0
    %295 = vmatpush2.xpose.msra.mxu0 0.0
    %296 = vmatprep.subr.mxu0 0.0
    %297 = vmatpush2.xpose.msra.mxu0 0.0
    %298 = vmatprep.subr.mxu0 0.0
    %299 = vmatpush2.xpose.msra.mxu0 0.0
    %300 = vmatprep.subr.mxu0 0.0
    %301 = vmatpush2.xpose.msra.mxu0 0.0
    %302 = vmatprep.subr.mxu0 0.0
    %303 = vmatpush2.xpose.msra.mxu0 0.0
    %304 = vmatprep.subr.mxu0 0.0
    %305 = vmatpush2.xpose.msra.mxu0 0.0
    %306 = vmatprep.subr.mxu0 0.0
    %307 = vmatpush2.xpose.msra.mxu0 0.0
    %308 = vmatprep.subr.mxu0 0.0
    %309 = vmatpush2.xpose.msra.mxu0 0.0
    %310 = vmatprep.subr.mxu0 0.0
    %311 = vmatpush2.xpose.msra.mxu0 0.0
    %312 = vmatprep.subr.mxu0 0.0
    %313 = vmatpush2.xpose.msra.mxu0 0.0
    %314 = vmatprep.subr.mxu0 0.0
    %315 = vmatpush2.xpose.msra.mxu0 0.0
    %316 = vmatprep.subr.mxu0 0.0
    %317 = vmatpush2.xpose.msra.mxu0 0.0
    %318 = vmatprep.mubr.f32.mxu0 0.0
    %319 = vmatmul.mubr.f32.gmra.mxu0 %v249
    %v320 = vpop.f32.mrf.mxu0
    %v321 = vadd.f32 %v247, %v320
    %v322 = vpop.f32.mrf.mxu0
    %323 = vdwg.mxu0
    %v324 = vxor.u32 %v321, 2147483648
    %v325 = vmul.f32 %v324, 1.442695
    %v326 = vpow.pop %v325
    %v327 = vadd.f32 %v326, 1.0
    %v328 = vrcp.pop %v327
    %v329 = vmul.f32 1.0, %v328
    %vm330 = vcmask 57344
    %331 = vst.msk [vmem:[#allocation11] sm:$0x1] %vm330, %v329
    // Predicated region
    $region46: #{tpu_custom_call.1} parent=1 // pred_check
      _
    $region47: #{tpu_custom_call.1} parent=1 // pred_check_branch
      %333 = sbr.rel (0) target = $region49
    $region48: #{tpu_custom_call.1} parent=1 // pred_region
      %s335 = ssub.s32 16, 16
      %336 = vsyncadd [#allocation5], %s335
      %s338 = sshll.u32 [#allocation11], 4
      %s339 = int_to_ptr.vmem [resolvable:$true] %s338
      %341 = dma.vmem_to_hbm [thread:$0]  %s339, 16, %s7, [#allocation5]
    $region49: #{tpu_custom_call.1} parent=1 // pred_fallthru
      _
    // Predicated region
    $region50: #{tpu_custom_call.1} parent=1 // pred_check
      _
    $region51: #{tpu_custom_call.1} parent=1 // pred_check_branch
      %343 = sbr.rel (0) target = $region53
    $region52: #{tpu_custom_call.1} parent=1 // pred_region
      %344 = dma.done [#allocation5], 16
    $region53: #{tpu_custom_call.1} parent=1 // pred_fallthru
      _
    %345 = vsyncpa [#allocation4], 1
    %346 = vsyncpa [#allocation7], 1
    %347 = vsyncpa [#allocation10], 1
    %348 = vsyncpa [#allocation5], 1

</llo_original>
